<compile_context>
chip_gen: v6e
topology: v6e:2x2x1
jax: 0.10.0
libtpu: 0.0.40
codegen_flags: <defaults>
</compile_context>

<pallas_src>
import jax
import jax.numpy as jnp
from jax.experimental import pallas as pl
from jax.experimental.pallas import tpu as pltpu

_LANES = 128


def _smooth_l1_sum_kernel(gx_ref, gt_ref, out_ref):
    i = pl.program_id(1)

    @pl.when(i == 0)
    def _():
        out_ref[...] = jnp.zeros_like(out_ref)

    d = gx_ref[...].astype(jnp.float32) - gt_ref[...].astype(jnp.float32)
    ad = jnp.abs(d)
    # SmoothL1 (beta=1.0): 0.5*d^2 if |d| < 1 else |d| - 0.5
    loss = jnp.where(ad < 1.0, 0.5 * d * d, ad - 0.5)
    # Fold (block_rows, 128) -> (8, 128) with pure vreg adds (VPU only);
    # the cross-lane/sublane reduction is deferred to the wrapper.
    out_ref[...] += loss.reshape(-1, 8, _LANES).sum(axis=0)


def _smooth_l1_elems(gx, gt):
    d = gx.astype(jnp.float32) - gt.astype(jnp.float32)
    ad = jnp.abs(d)
    return jnp.where(ad < 1.0, 0.5 * d * d, ad - 0.5)


def smooth_l1_loss(gx, gt, *, block_rows=1024):
    assert gx.shape == gt.shape
    n = gx.size
    assert n > 0

    gx_flat = gx.reshape(-1)
    gt_flat = gt.reshape(-1)

    rows_full = n // _LANES
    if rows_full < 8:
        # Tiny input: zero-pad both operands up to a single (8,128) tile.
        # Zero padding gives d = 0 -> loss = 0, so no mask is needed.
        pad = 8 * _LANES - n
        gx_main = jnp.pad(gx_flat, (0, pad)).reshape(8, _LANES)
        gt_main = jnp.pad(gt_flat, (0, pad)).reshape(8, _LANES)
        br, cores, tiles_per_core = 8, 1, 1
        tail_sum = jnp.float32(0.0)
    else:
        br = max(8, (min(block_rows, rows_full) // 8) * 8)   # sublane multiple
        tiles = rows_full // br
        cores = 2 if tiles >= 2 else 1          # megacore split (v7x); no-op on 1-TC chips
        tiles_per_core = tiles // cores
        rows_main = cores * tiles_per_core * br
        n_main = rows_main * _LANES
        # Free view when n_main == n (typical aligned NCHW sizes); otherwise a
        # prefix slice, and the small remainder is summed in plain JAX below.
        gx_main = gx_flat[:n_main].reshape(rows_main, _LANES)
        gt_main = gt_flat[:n_main].reshape(rows_main, _LANES)
        if n_main < n:
            tail_sum = jnp.sum(_smooth_l1_elems(gx_flat[n_main:], gt_flat[n_main:]))
        else:
            tail_sum = jnp.float32(0.0)

    partials = pl.pallas_call(
        _smooth_l1_sum_kernel,
        out_shape=jax.ShapeDtypeStruct((cores, 8, _LANES), jnp.float32),
        grid_spec=pltpu.PrefetchScalarGridSpec(
            num_scalar_prefetch=0,
            grid=(cores, tiles_per_core),
            in_specs=[
                pl.BlockSpec((br, _LANES),
                             lambda c, i: (c * tiles_per_core + i, 0)),
                pl.BlockSpec((br, _LANES),
                             lambda c, i: (c * tiles_per_core + i, 0)),
            ],
            out_specs=pl.BlockSpec((None, 8, _LANES), lambda c, i: (c, 0, 0)),
        ),
        compiler_params=pltpu.CompilerParams(
            dimension_semantics=("parallel", "arbitrary")),
    )(gx_main, gt_main)

    total = jnp.sum(partials) + tail_sum
    return total / jnp.float32(n)


if __name__ == "__main__":
    key = jax.random.PRNGKey(0)
    k1, k2 = jax.random.split(key)
    # Small NCHW-shaped inputs (batch=2, channels=4, spatial=16x16).
    gx = jax.random.normal(k1, (2, 4, 16, 16), dtype=jnp.float32)
    gt = jax.random.normal(k2, (2, 4, 16, 16), dtype=jnp.float32)

    loss = smooth_l1_loss(gx, gt)
    jax.block_until_ready(loss)

    # Pure-JAX reference check.
    d = gx - gt
    ad = jnp.abs(d)
    ref = jnp.mean(jnp.where(ad < 1.0, 0.5 * d * d, ad - 0.5))
    assert jnp.allclose(loss, ref, atol=1e-6, rtol=1e-6), (loss, ref)

    print("KERNEL_OK")
</pallas_src>

<mosaic_0001>
module attributes {stable_mosaic.version = 11 : i64} {
  func.func @_smooth_l1_sum_kernel(%arg0: i32, %arg1: i32, %arg2: memref<16x128xf32, #tpu.memory_space<vmem>>, %arg3: memref<16x128xf32, #tpu.memory_space<vmem>>, %arg4: memref<1x8x128xf32, #tpu.memory_space<vmem>>) attributes {dimension_semantics = [#tpu.dimension_semantics<parallel>, #tpu.dimension_semantics<arbitrary>], iteration_bounds = array<i64: 1, 1>, scalar_prefetch = 0 : i64, scratch_operands = 0 : i64, tpu.core_type = #tpu.core_type<tc>, window_params = [{transform_indices = @transform_0, window_bounds = array<i64: 16, 128>}, {transform_indices = @transform_1, window_bounds = array<i64: 16, 128>}, {transform_indices = @transform_2, window_bounds = array<i64: 1, 8, 128>}]} {
    %c0_i32 = arith.constant 0 : i32
    %0 = arith.cmpi eq, %arg1, %c0_i32 : i32
    %1 = arith.extui %0 : i1 to i32
    %c0_i32_0 = arith.constant 0 : i32
    %2 = arith.cmpi ne, %1, %c0_i32_0 : i32
    scf.if %2 {
      %cst_13 = arith.constant 0.000000e+00 : f32
      %23 = vector.broadcast %cst_13 : f32 to vector<8x128xf32>
      %c0_14 = arith.constant 0 : index
      %c0_15 = arith.constant 0 : index
      %c0_16 = arith.constant 0 : index
      %24 = vector.load %arg4[%c0_14, %c0_15, %c0_16] : memref<1x8x128xf32, #tpu.memory_space<vmem>>, vector<1x8x128xf32>
      %25 = vector.shape_cast %24 : vector<1x8x128xf32> to vector<8x128xf32>
      %26 = vector.shape_cast %23 : vector<8x128xf32> to vector<1x8x128xf32>
      tpu.vector_store %arg4[%c0_14, %c0_15, %c0_16], %26 {strides = array<i32>} : memref<1x8x128xf32, #tpu.memory_space<vmem>>, vector<1x8x128xf32>,
    } else {
    }
    %c0 = arith.constant 0 : index
    %c0_1 = arith.constant 0 : index
    %3 = vector.load %arg2[%c0, %c0_1] : memref<16x128xf32, #tpu.memory_space<vmem>>, vector<16x128xf32>
    %c0_2 = arith.constant 0 : index
    %c0_3 = arith.constant 0 : index
    %4 = vector.load %arg3[%c0_2, %c0_3] : memref<16x128xf32, #tpu.memory_space<vmem>>, vector<16x128xf32>
    %5 = arith.subf %3, %4 : vector<16x128xf32>
    %6 = math.absf %5 : vector<16x128xf32>
    %cst = arith.constant 1.000000e+00 : f32
    %7 = vector.broadcast %cst : f32 to vector<16x128xf32>
    %8 = arith.cmpf olt, %6, %7 : vector<16x128xf32>
    %cst_4 = arith.constant 5.000000e-01 : f32
    %9 = vector.broadcast %cst_4 : f32 to vector<16x128xf32>
    %10 = arith.mulf %9, %5 : vector<16x128xf32>
    %11 = arith.mulf %10, %5 : vector<16x128xf32>
    %cst_5 = arith.constant 5.000000e-01 : f32
    %12 = vector.broadcast %cst_5 : f32 to vector<16x128xf32>
    %13 = arith.subf %6, %12 : vector<16x128xf32>
    %14 = arith.select %8, %11, %13 : vector<16x128xi1>, vector<16x128xf32>
    %c0_6 = arith.constant 0 : index
    %c0_7 = arith.constant 0 : index
    %c0_8 = arith.constant 0 : index
    %15 = vector.load %arg4[%c0_6, %c0_7, %c0_8] : memref<1x8x128xf32, #tpu.memory_space<vmem>>, vector<1x8x128xf32>
    %16 = vector.shape_cast %15 : vector<1x8x128xf32> to vector<8x128xf32>
    %17 = vector.shape_cast %14 : vector<16x128xf32> to vector<2x8x128xf32>
    %cst_9 = arith.constant dense<0.000000e+00> : vector<8x128xf32>
    %18 = vector.multi_reduction <add>, %17, %cst_9 [0] : vector<2x8x128xf32> to vector<8x128xf32>
    %19 = arith.addf %16, %18 : vector<8x128xf32>
    %c0_10 = arith.constant 0 : index
    %c0_11 = arith.constant 0 : index
    %c0_12 = arith.constant 0 : index
    %20 = vector.load %arg4[%c0_10, %c0_11, %c0_12] : memref<1x8x128xf32, #tpu.memory_space<vmem>>, vector<1x8x128xf32>
    %21 = vector.shape_cast %20 : vector<1x8x128xf32> to vector<8x128xf32>
    %22 = vector.shape_cast %19 : vector<8x128xf32> to vector<1x8x128xf32>
    tpu.vector_store %arg4[%c0_10, %c0_11, %c0_12], %22 {strides = array<i32>} : memref<1x8x128xf32, #tpu.memory_space<vmem>>, vector<1x8x128xf32>,
    return
  }
  func.func @transform_0(%arg0: i32, %arg1: i32) -> (i32, i32) {
    %c1_i32 = arith.constant 1 : i32
    %0 = arith.muli %arg0, %c1_i32 : i32
    %1 = arith.addi %0, %arg1 : i32
    %c0_i32 = arith.constant 0 : i32
    %c0_i32_0 = arith.constant 0 : i32
    return %1, %c0_i32 : i32, i32
  }
  func.func @transform_1(%arg0: i32, %arg1: i32) -> (i32, i32) {
    %c1_i32 = arith.constant 1 : i32
    %0 = arith.muli %arg0, %c1_i32 : i32
    %1 = arith.addi %0, %arg1 : i32
    %c0_i32 = arith.constant 0 : i32
    %c0_i32_0 = arith.constant 0 : i32
    return %1, %c0_i32 : i32, i32
  }
  func.func @transform_2(%arg0: i32, %arg1: i32) -> (i32, i32, i32) {
    %c0_i32 = arith.constant 0 : i32
    %c0_i32_0 = arith.constant 0 : i32
    %c0_i32_1 = arith.constant 0 : i32
    return %arg0, %c0_i32, %c0_i32_0 : i32, i32, i32
  }
}

</mosaic_0001>

<llo_original>
// kernel: tpu_custom_call.1
$region0: #{tpu_custom_call.1}
  #allocation0 [shape = 'u32[]', space=smem, size = 0x4, offset = 0x4, fixed_abs, tag = 'smem constant byte address 0x4 - core index']
  #allocation1 [shape = 'u32[144,128]{1,0:T(1,128)}', space=vmem, size = 0x12000, scoped, tag = 'internal scratch']
  %s0 = inlined_call_operand.hbm [shape: f32[16,128], index: 0, kind: input, shape index: {}]
  %s1 = inlined_call_operand.hbm [shape: f32[16,128], index: 1, kind: input, shape index: {}]
  %s2 = inlined_call_operand.hbm [shape: f32[1,8,128], index: 2, kind: output, shape index: {}]
  %s3 = sld [smem:[#allocation0]]
  $region30: #{tpu_custom_call.1} parent=0
    _
  %s5 = ssub.s32 1, %s3
  %s6 = scalar_select 0, %s5, %s3
  $region1: #{tpu_custom_call.1} parent=0
    #allocation2 [shape = 'u8[8192]{0}', space=vmem, size = 0x2000, scoped, tag = 'input window, operand 0, single buffered']
    #allocation3 [shape = 's32[1]{0}', space=sflag, size = 0x4, scoped, tag = 'scoped memory for tpu_custom_call.1']
    #allocation4 [shape = 's32[1]{0}', space=sflag, size = 0x4, scoped, tag = 'scoped memory for tpu_custom_call.1']
    #allocation5 [shape = 'u8[8192]{0}', space=vmem, size = 0x2000, scoped, tag = 'input window, operand 1, single buffered']
    #allocation6 [shape = 's32[1]{0}', space=sflag, size = 0x4, scoped, tag = 'scoped memory for tpu_custom_call.1']
    #allocation7 [shape = 'u8[4096]{0}', space=vmem, size = 0x1000, scoped, tag = 'output window, operand 0, single buffered']
    %7 = vsyncpa [#allocation3], 0
    %8 = vsyncpa [#allocation6], 0
    %9 = vsyncpa [#allocation4], 0
    // Predicated region
    $region2: #{tpu_custom_call.1} parent=1 // pred_check
      _
    $region3: #{tpu_custom_call.1} parent=1 // pred_check_branch
      %11 = sbr.rel (0) target = $region5
    $region4: #{tpu_custom_call.1} parent=1 // pred_region
      %s12 = sadd.s32 0, 0
      %s13 = smul.u32 2, %s12
      %s15 = ssub.s32 256, 256
      %16 = vsyncadd [#allocation3], %s15
      %s17 = smul.addr %s13, 128
      %s18 = scalar_lea.hbm %s0, %s17
      %s19 = sshll.u32 [#allocation2], 4
      %s20 = int_to_ptr.vmem [resolvable:$true] %s19
      %25 = dma.hbm_to_vmem [thread:$0]  %s18, 256, %s20, [#allocation3], 128, 128, 8
    $region5: #{tpu_custom_call.1} parent=1 // pred_fallthru
      _
    // Predicated region
    $region6: #{tpu_custom_call.1} parent=1 // pred_check
      _
    $region7: #{tpu_custom_call.1} parent=1 // pred_check_branch
      %27 = sbr.rel (0) target = $region9
    $region8: #{tpu_custom_call.1} parent=1 // pred_region
      %s28 = sadd.s32 0, 0
      %s29 = smul.u32 2, %s28
      %s31 = ssub.s32 256, 256
      %32 = vsyncadd [#allocation6], %s31
      %s33 = smul.addr %s29, 128
      %s34 = scalar_lea.hbm %s1, %s33
      %s35 = sshll.u32 [#allocation5], 4
      %s36 = int_to_ptr.vmem [resolvable:$true] %s35
      %41 = dma.hbm_to_vmem [thread:$0]  %s34, 256, %s36, [#allocation6], 128, 128, 8
    $region9: #{tpu_custom_call.1} parent=1 // pred_fallthru
      _
    // Predicated region
    $region10: #{tpu_custom_call.1} parent=1 // pred_check
      _
    $region11: #{tpu_custom_call.1} parent=1 // pred_check_branch
      %43 = sbr.rel (0) target = $region13
    $region12: #{tpu_custom_call.1} parent=1 // pred_region
      %44 = dma.done [#allocation3], 256
    $region13: #{tpu_custom_call.1} parent=1 // pred_fallthru
      _
    // Predicated region
    $region14: #{tpu_custom_call.1} parent=1 // pred_check
      _
    $region15: #{tpu_custom_call.1} parent=1 // pred_check_branch
      %46 = sbr.rel (0) target = $region17
    $region16: #{tpu_custom_call.1} parent=1 // pred_region
      %47 = dma.done [#allocation6], 256
    $region17: #{tpu_custom_call.1} parent=1 // pred_fallthru
      _
    %s48 = sadd.s32 0, 0
    %s49 = smul.u32 2, %s48
    %s50 = sadd.s32 0, 0
    %s51 = smul.u32 2, %s50
    %p52 = scmp.eq.s32.totalorder 0, 0
    // Predicated region
    $region18: #{tpu_custom_call.1} parent=1 // pred_check
      %p53 = pneg %p52
    $region19: #{tpu_custom_call.1} parent=1 // pred_check_branch
      %55 = sbr.rel (%p53) target = $region21
    $region20: #{tpu_custom_call.1} parent=1 // pred_region
      %56 = vst [vmem:[#allocation7] sm:$0xff] 0.0
    $region21: #{tpu_custom_call.1} parent=1 // pred_fallthru
      _
    %v57 = vld [vmem:[#allocation2] sm:$0xff]
    %v58 = vld [vmem:[#allocation2 + $0x8] sm:$0xff]
    %v59 = vld [vmem:[#allocation5] sm:$0xff]
    %v60 = vld [vmem:[#allocation5 + $0x8] sm:$0xff]
    %v61 = vsub.f32 %v57, %v59
    %v62 = vsub.f32 %v58, %v60
    %v63 = vand.u32 2147483647, %v61
    %v64 = vand.u32 2147483647, %v62
    %vm65 = vcmp.lt.f32.partialorder %v63, 1.0
    %vm66 = vcmp.lt.f32.partialorder %v64, 1.0
    %v67 = vmul.f32 %v61, 0.5
    %v68 = vmul.f32 %v62, 0.5
    %v69 = vmul.f32 %v67, %v61
    %v70 = vmul.f32 %v68, %v62
    %v71 = vsub.f32 %v63, 0.5
    %v72 = vsub.f32 %v64, 0.5
    %v73 = vsel %vm65, %v69, %v71
    %v74 = vsel %vm66, %v70, %v72
    %v75 = vld [vmem:[#allocation7] sm:$0xff]
    %v76 = vadd.f32 %v73, %v74
    %v77 = vadd.f32 %v75, %v76
    %78 = vst [vmem:[#allocation7] sm:$0xff] %v77
    // Predicated region
    $region22: #{tpu_custom_call.1} parent=1 // pred_check
      _
    $region23: #{tpu_custom_call.1} parent=1 // pred_check_branch
      %80 = sbr.rel (0) target = $region25
    $region24: #{tpu_custom_call.1} parent=1 // pred_region
      %s82 = ssub.s32 128, 128
      %83 = vsyncadd [#allocation4], %s82
      %s85 = sshll.u32 [#allocation7], 4
      %s86 = int_to_ptr.vmem [resolvable:$true] %s85
      %88 = dma.vmem_to_hbm [thread:$0]  %s86, 128, %s2, [#allocation4]
    $region25: #{tpu_custom_call.1} parent=1 // pred_fallthru
      _
    // Predicated region
    $region26: #{tpu_custom_call.1} parent=1 // pred_check
      _
    $region27: #{tpu_custom_call.1} parent=1 // pred_check_branch
      %90 = sbr.rel (0) target = $region29
    $region28: #{tpu_custom_call.1} parent=1 // pred_region
      %91 = dma.done [#allocation4], 128
    $region29: #{tpu_custom_call.1} parent=1 // pred_fallthru
      _
    %92 = vsyncpa [#allocation3], 1
    %93 = vsyncpa [#allocation6], 1
    %94 = vsyncpa [#allocation4], 1

</llo_original>
